<compile_context>
chip_gen: v7x
topology: tpu7x:2x2x1
jax: 0.10.0
libtpu: 0.0.40
codegen_flags: <defaults>
</compile_context>

<pallas_src>
import functools

import jax
import jax.numpy as jnp
from jax.experimental import pallas as pl
from jax.experimental.pallas import tpu as pltpu

INPUT_SIZE = 14
HIDDEN_SIZE1 = 32
HIDDEN_SIZE2 = HIDDEN_SIZE1 // 2
OUTPUT_SIZE = 2

# Default batch tile. Large multiple of 8: per-block x is only BM*14*4 B
# (~112 KiB at 2048, x2 buffers), so VMEM is never the limiter; big blocks get
# DMA chunks near the HBM roofline. Bump higher (8192+) on v7x if desired.
DEFAULT_BLOCK_ROWS = 2048


def _round_up(n, m):
    return ((n + m - 1) // m) * m


def mlp_kernel(x_ref, w1_ref, b1_ref, w2_ref, b2_ref, w3_ref, b3_ref, o_ref):
    # One batch tile: three small fused matmuls + ReLUs, f32 accumulation.
    x = x_ref[...]
    h1 = jnp.dot(x, w1_ref[...], preferred_element_type=jnp.float32) + b1_ref[...]
    h1 = jnp.maximum(h1, 0.0)
    # dropout(p=0.35) -> identity in eval mode
    h2 = jnp.dot(h1, w2_ref[...], preferred_element_type=jnp.float32) + b2_ref[...]
    h2 = jnp.maximum(h2, 0.0)
    out = jnp.dot(h2, w3_ref[...], preferred_element_type=jnp.float32) + b3_ref[...]
    o_ref[...] = out.astype(o_ref.dtype)


@functools.partial(jax.jit, static_argnames=("block_rows",))
def mlp_forward(x, params, *, block_rows=DEFAULT_BLOCK_ROWS):
    w1, b1, w2, b2, w3, b3 = params
    B = x.shape[0]

    # Pick the batch tile: at most `block_rows`, at least a multiple of 8,
    # never (needlessly) larger than the batch itself.
    bm = min(block_rows, _round_up(B, 8))
    b_pad = _round_up(B, bm)
    if b_pad != B:
        # Pad with zeros; padded rows produce garbage-free extra outputs that
        # are sliced away below. Keeps every grid step a full, aligned block.
        x = jnp.pad(x, ((0, b_pad - B), (0, 0)))

    grid = (b_pad // bm,)

    def const_spec(shape):
        # Full-array block, same tile for every grid step -> stays in VMEM.
        return pl.BlockSpec(shape, lambda i: tuple(0 for _ in shape))

    flops = 2 * b_pad * (INPUT_SIZE * HIDDEN_SIZE1
                         + HIDDEN_SIZE1 * HIDDEN_SIZE2
                         + HIDDEN_SIZE2 * OUTPUT_SIZE)
    weight_bytes = sum(int(a.size) * a.dtype.itemsize for a in (w1, b1, w2, b2, w3, b3))
    bytes_accessed = b_pad * (INPUT_SIZE + OUTPUT_SIZE) * 4 + weight_bytes

    out = pl.pallas_call(
        mlp_kernel,
        out_shape=jax.ShapeDtypeStruct((b_pad, OUTPUT_SIZE), jnp.float32),
        grid=grid,
        in_specs=[
            pl.BlockSpec((bm, INPUT_SIZE), lambda i: (i, 0)),
            const_spec(w1.shape), const_spec(b1.shape),
            const_spec(w2.shape), const_spec(b2.shape),
            const_spec(w3.shape), const_spec(b3.shape),
        ],
        out_specs=pl.BlockSpec((bm, OUTPUT_SIZE), lambda i: (i, 0)),
        compiler_params=pltpu.CompilerParams(
            dimension_semantics=("parallel",),  # shard batch grid across TCs on v7x
        ),
        cost_estimate=pl.CostEstimate(
            flops=flops, transcendentals=0, bytes_accessed=bytes_accessed),
    )(x, w1, b1, w2, b2, w3, b3)

    return out[:B]


def init_params(key):
    """Deterministic init matching nn.Linear shapes (stored as (in, out))."""
    keys = jax.random.split(key, 6)

    def linear(kw, kb, fan_in, fan_out):
        bound = 1.0 / jnp.sqrt(fan_in)
        w = jax.random.uniform(kw, (fan_in, fan_out), jnp.float32, -bound, bound)
        b = jax.random.uniform(kb, (1, fan_out), jnp.float32, -bound, bound)
        return w, b

    w1, b1 = linear(keys[0], keys[1], INPUT_SIZE, HIDDEN_SIZE1)
    w2, b2 = linear(keys[2], keys[3], HIDDEN_SIZE1, HIDDEN_SIZE2)
    w3, b3 = linear(keys[4], keys[5], HIDDEN_SIZE2, OUTPUT_SIZE)
    return (w1, b1, w2, b2, w3, b3)


def mlp_reference(x, params):
    w1, b1, w2, b2, w3, b3 = params
    h1 = jnp.maximum(x @ w1 + b1, 0.0)
    h2 = jnp.maximum(h1 @ w2 + b2, 0.0)
    return h2 @ w3 + b3


if __name__ == "__main__":
    key = jax.random.PRNGKey(0)
    kx, kx2, kp = jax.random.split(key, 3)
    params = init_params(kp)

    # Small smoke test (single grid step).
    batch = 8
    x_small = jax.random.normal(kx, (batch, INPUT_SIZE), dtype=jnp.float32)
    out_small = jax.block_until_ready(mlp_forward(x_small, params))
    ref_small = mlp_reference(x_small, params)
    assert out_small.shape == (batch, OUTPUT_SIZE), out_small.shape
    assert jnp.allclose(out_small, ref_small, atol=1e-5, rtol=1e-5), "mismatch (small)"

    # Tiled path: multiple grid steps + ragged tail (300 rows, 128-row blocks).
    batch2 = 300
    x_tiled = jax.random.normal(kx2, (batch2, INPUT_SIZE), dtype=jnp.float32)
    out_tiled = jax.block_until_ready(mlp_forward(x_tiled, params, block_rows=128))
    ref_tiled = mlp_reference(x_tiled, params)
    assert out_tiled.shape == (batch2, OUTPUT_SIZE), out_tiled.shape
    assert jnp.allclose(out_tiled, ref_tiled, atol=1e-5, rtol=1e-5), "mismatch (tiled)"

    print("KERNEL_OK")
</pallas_src>

<mosaic_0001>
module attributes {stable_mosaic.version = 11 : i64} {
  func.func @mlp_kernel(%arg0: i32, %arg1: memref<8x14xf32, #tpu.memory_space<vmem>>, %arg2: memref<14x32xf32, #tpu.memory_space<vmem>>, %arg3: memref<1x32xf32, #tpu.memory_space<vmem>>, %arg4: memref<32x16xf32, #tpu.memory_space<vmem>>, %arg5: memref<1x16xf32, #tpu.memory_space<vmem>>, %arg6: memref<16x2xf32, #tpu.memory_space<vmem>>, %arg7: memref<1x2xf32, #tpu.memory_space<vmem>>, %arg8: memref<8x2xf32, #tpu.memory_space<vmem>>) attributes {dimension_semantics = [#tpu.dimension_semantics<parallel>], iteration_bounds = array<i64: 1>, scalar_prefetch = 0 : i64, scratch_operands = 0 : i64, tpu.core_type = #tpu.core_type<tc>, window_params = [{transform_indices = @transform_0, window_bounds = array<i64: 8, 14>}, {pipeline_mode = #tpu.pipeline_mode<synchronous>, transform_indices = @transform_1, window_bounds = array<i64: 14, 32>}, {pipeline_mode = #tpu.pipeline_mode<synchronous>, transform_indices = @transform_2, window_bounds = array<i64: 1, 32>}, {pipeline_mode = #tpu.pipeline_mode<synchronous>, transform_indices = @transform_3, window_bounds = array<i64: 32, 16>}, {pipeline_mode = #tpu.pipeline_mode<synchronous>, transform_indices = @transform_4, window_bounds = array<i64: 1, 16>}, {pipeline_mode = #tpu.pipeline_mode<synchronous>, transform_indices = @transform_5, window_bounds = array<i64: 16, 2>}, {pipeline_mode = #tpu.pipeline_mode<synchronous>, transform_indices = @transform_6, window_bounds = array<i64: 1, 2>}, {transform_indices = @transform_7, window_bounds = array<i64: 8, 2>}]} {
    %c0 = arith.constant 0 : index
    %c0_0 = arith.constant 0 : index
    %0 = vector.load %arg1[%c0, %c0_0] : memref<8x14xf32, #tpu.memory_space<vmem>>, vector<8x14xf32>
    %c0_1 = arith.constant 0 : index
    %c0_2 = arith.constant 0 : index
    %1 = vector.load %arg2[%c0_1, %c0_2] : memref<14x32xf32, #tpu.memory_space<vmem>>, vector<14x32xf32>
    %cst = arith.constant dense<0.000000e+00> : vector<8x32xf32>
    %2 = tpu.matmul %0, %1, %cst {dimension_numbers = #tpu.dot_dimension_numbers<[1], [0], [0], [1], [0, 0, 1, 1], [], []>} : vector<8x14xf32>, vector<14x32xf32>, vector<8x32xf32> -> vector<8x32xf32>
    %c0_3 = arith.constant 0 : index
    %c0_4 = arith.constant 0 : index
    %3 = vector.load %arg3[%c0_3, %c0_4] : memref<1x32xf32, #tpu.memory_space<vmem>>, vector<1x32xf32>
    %4 = vector.broadcast %3 : vector<1x32xf32> to vector<8x32xf32>
    %5 = arith.addf %2, %4 : vector<8x32xf32>
    %cst_5 = arith.constant 0.000000e+00 : f32
    %6 = vector.broadcast %cst_5 : f32 to vector<8x32xf32>
    %7 = arith.maximumf %5, %6 : vector<8x32xf32>
    %c0_6 = arith.constant 0 : index
    %c0_7 = arith.constant 0 : index
    %8 = vector.load %arg4[%c0_6, %c0_7] : memref<32x16xf32, #tpu.memory_space<vmem>>, vector<32x16xf32>
    %cst_8 = arith.constant dense<0.000000e+00> : vector<8x16xf32>
    %9 = tpu.matmul %7, %8, %cst_8 {dimension_numbers = #tpu.dot_dimension_numbers<[1], [0], [0], [1], [0, 0, 1, 1], [], []>} : vector<8x32xf32>, vector<32x16xf32>, vector<8x16xf32> -> vector<8x16xf32>
    %c0_9 = arith.constant 0 : index
    %c0_10 = arith.constant 0 : index
    %10 = vector.load %arg5[%c0_9, %c0_10] : memref<1x16xf32, #tpu.memory_space<vmem>>, vector<1x16xf32>
    %11 = vector.broadcast %10 : vector<1x16xf32> to vector<8x16xf32>
    %12 = arith.addf %9, %11 : vector<8x16xf32>
    %cst_11 = arith.constant 0.000000e+00 : f32
    %13 = vector.broadcast %cst_11 : f32 to vector<8x16xf32>
    %14 = arith.maximumf %12, %13 : vector<8x16xf32>
    %c0_12 = arith.constant 0 : index
    %c0_13 = arith.constant 0 : index
    %15 = vector.load %arg6[%c0_12, %c0_13] : memref<16x2xf32, #tpu.memory_space<vmem>>, vector<16x2xf32>
    %cst_14 = arith.constant dense<0.000000e+00> : vector<8x2xf32>
    %16 = tpu.matmul %14, %15, %cst_14 {dimension_numbers = #tpu.dot_dimension_numbers<[1], [0], [0], [1], [0, 0, 1, 1], [], []>} : vector<8x16xf32>, vector<16x2xf32>, vector<8x2xf32> -> vector<8x2xf32>
    %c0_15 = arith.constant 0 : index
    %c0_16 = arith.constant 0 : index
    %17 = vector.load %arg7[%c0_15, %c0_16] : memref<1x2xf32, #tpu.memory_space<vmem>>, vector<1x2xf32>
    %18 = vector.broadcast %17 : vector<1x2xf32> to vector<8x2xf32>
    %19 = arith.addf %16, %18 : vector<8x2xf32>
    %c0_17 = arith.constant 0 : index
    %c0_18 = arith.constant 0 : index
    %20 = vector.load %arg8[%c0_17, %c0_18] : memref<8x2xf32, #tpu.memory_space<vmem>>, vector<8x2xf32>
    tpu.vector_store %arg8[%c0_17, %c0_18], %19 {strides = array<i32>} : memref<8x2xf32, #tpu.memory_space<vmem>>, vector<8x2xf32>,
    return
  }
  func.func @transform_0(%arg0: i32) -> (i32, i32) {
    %c0_i32 = arith.constant 0 : i32
    %c0_i32_0 = arith.constant 0 : i32
    return %arg0, %c0_i32 : i32, i32
  }
  func.func @transform_1(%arg0: i32) -> (i32, i32) {
    %c0_i32 = arith.constant 0 : i32
    %c0_i32_0 = arith.constant 0 : i32
    %c0_i32_1 = arith.constant 0 : i32
    return %c0_i32, %c0_i32_0 : i32, i32
  }
  func.func @transform_2(%arg0: i32) -> (i32, i32) {
    %c0_i32 = arith.constant 0 : i32
    %c0_i32_0 = arith.constant 0 : i32
    %c0_i32_1 = arith.constant 0 : i32
    return %c0_i32, %c0_i32_0 : i32, i32
  }
  func.func @transform_3(%arg0: i32) -> (i32, i32) {
    %c0_i32 = arith.constant 0 : i32
    %c0_i32_0 = arith.constant 0 : i32
    %c0_i32_1 = arith.constant 0 : i32
    return %c0_i32, %c0_i32_0 : i32, i32
  }
  func.func @transform_4(%arg0: i32) -> (i32, i32) {
    %c0_i32 = arith.constant 0 : i32
    %c0_i32_0 = arith.constant 0 : i32
    %c0_i32_1 = arith.constant 0 : i32
    return %c0_i32, %c0_i32_0 : i32, i32
  }
  func.func @transform_5(%arg0: i32) -> (i32, i32) {
    %c0_i32 = arith.constant 0 : i32
    %c0_i32_0 = arith.constant 0 : i32
    %c0_i32_1 = arith.constant 0 : i32
    return %c0_i32, %c0_i32_0 : i32, i32
  }
  func.func @transform_6(%arg0: i32) -> (i32, i32) {
    %c0_i32 = arith.constant 0 : i32
    %c0_i32_0 = arith.constant 0 : i32
    %c0_i32_1 = arith.constant 0 : i32
    return %c0_i32, %c0_i32_0 : i32, i32
  }
  func.func @transform_7(%arg0: i32) -> (i32, i32) {
    %c0_i32 = arith.constant 0 : i32
    %c0_i32_0 = arith.constant 0 : i32
    return %arg0, %c0_i32 : i32, i32
  }
}

</mosaic_0001>

<llo_original>
// kernel: mlp_forward.1
$region0: #{mlp_forward.1}
  #allocation0 [shape = 'u32[]', space=smem, size = 0x4, offset = 0x4, fixed_abs, tag = 'smem constant byte address 0x4 - core index']
  #allocation1 [shape = 'u32[144,128]{1,0:T(1,128)}', space=vmem, size = 0x12000, scoped, tag = 'internal scratch']
  %s0 = inlined_call_operand.vmem [shape: f32[8,14], index: 0, kind: input, shape index: {}]
  %s1 = inlined_call_operand.vmem [shape: f32[14,32], index: 1, kind: input, shape index: {}]
  %s2 = inlined_call_operand.vmem [shape: f32[1,32], index: 2, kind: input, shape index: {}]
  %s3 = inlined_call_operand.vmem [shape: f32[32,16], index: 3, kind: input, shape index: {}]
  %s4 = inlined_call_operand.vmem [shape: f32[1,16], index: 4, kind: input, shape index: {}]
  %s5 = inlined_call_operand.vmem [shape: f32[16,2], index: 5, kind: input, shape index: {}]
  %s6 = inlined_call_operand.vmem [shape: f32[1,2], index: 6, kind: input, shape index: {}]
  %s7 = inlined_call_operand.vmem [shape: f32[8,2], index: 7, kind: output, shape index: {}]
  %s8 = sld [smem:[#allocation0]]
  $region38: #{mlp_forward.1} parent=0
    _
  %s10 = ssub.s32 1, %s8
  %s11 = scalar_select 0, %s10, %s8
  // Predicated region
  $region2: #{mlp_forward.1} parent=0 // pred_check
    _
  $region3: #{mlp_forward.1} parent=0 // pred_check_branch
    %13 = sbr.rel (0) target = $region5
  $region4: #{mlp_forward.1} parent=0 // pred_region
    _
  $region5: #{mlp_forward.1} parent=0 // pred_fallthru
    _
  // Predicated region
  $region6: #{mlp_forward.1} parent=0 // pred_check
    _
  $region7: #{mlp_forward.1} parent=0 // pred_check_branch
    %15 = sbr.rel (0) target = $region9
  $region8: #{mlp_forward.1} parent=0 // pred_region
    _
  $region9: #{mlp_forward.1} parent=0 // pred_fallthru
    _
  // Predicated region
  $region10: #{mlp_forward.1} parent=0 // pred_check
    _
  $region11: #{mlp_forward.1} parent=0 // pred_check_branch
    %17 = sbr.rel (0) target = $region13
  $region12: #{mlp_forward.1} parent=0 // pred_region
    _
  $region13: #{mlp_forward.1} parent=0 // pred_fallthru
    _
  // Predicated region
  $region14: #{mlp_forward.1} parent=0 // pred_check
    _
  $region15: #{mlp_forward.1} parent=0 // pred_check_branch
    %19 = sbr.rel (0) target = $region17
  $region16: #{mlp_forward.1} parent=0 // pred_region
    _
  $region17: #{mlp_forward.1} parent=0 // pred_fallthru
    _
  // Predicated region
  $region18: #{mlp_forward.1} parent=0 // pred_check
    _
  $region19: #{mlp_forward.1} parent=0 // pred_check_branch
    %21 = sbr.rel (0) target = $region21
  $region20: #{mlp_forward.1} parent=0 // pred_region
    _
  $region21: #{mlp_forward.1} parent=0 // pred_fallthru
    _
  // Predicated region
  $region22: #{mlp_forward.1} parent=0 // pred_check
    _
  $region23: #{mlp_forward.1} parent=0 // pred_check_branch
    %23 = sbr.rel (0) target = $region25
  $region24: #{mlp_forward.1} parent=0 // pred_region
    _
  $region25: #{mlp_forward.1} parent=0 // pred_fallthru
    _
  // Predicated region
  $region26: #{mlp_forward.1} parent=0 // pred_check
    _
  $region27: #{mlp_forward.1} parent=0 // pred_check_branch
    %25 = sbr.rel (0) target = $region29
  $region28: #{mlp_forward.1} parent=0 // pred_region
    _
  $region29: #{mlp_forward.1} parent=0 // pred_fallthru
    _
  %v26 = vld [vmem:[%s0] sm:$0xff]
  %v27 = vld [vmem:[%s1] sm:$0xff]
  %v28 = vld [vmem:[%s1 + $0x8] sm:$0x3f]
  %v29 = vld [vmem:[%s2] sm:$0x1]
  %v31 = vlaneseq
  %v32 = vshrl.u32 %v31, 7
  %v33 = vsub.s32 0, %v32
  %v34 = vrot.slane %v29, %v33
  %vm36 = vcmask 113664
  %v38 = vsel %vm36, %v26, 0
  %vm40 = vcmask 1045504
  %v42 = vsel %vm40, %v28, 0
  %44 = vmatprep.subr.mxu0 0.0
  %45 = vmatpush1.msra.mxu0 %v27
  %46 = vmatprep.subr.mxu0 0.0
  %47 = vmatpush1.msra.mxu0 %v42
  %48 = vmatprep.subr.mxu0 0.0
  %49 = vmatpush1.msra.mxu0 0.0
  %50 = vmatprep.subr.mxu0 0.0
  %51 = vmatpush1.msra.mxu0 0.0
  %52 = vmatprep.subr.mxu0 0.0
  %53 = vmatpush1.msra.mxu0 0.0
  %54 = vmatprep.subr.mxu0 0.0
  %55 = vmatpush1.msra.mxu0 0.0
  %56 = vmatprep.subr.mxu0 0.0
  %57 = vmatpush1.msra.mxu0 0.0
  %58 = vmatprep.subr.mxu0 0.0
  %59 = vmatpush1.msra.mxu0 0.0
  %60 = vmatprep.subr.mxu0 0.0
  %61 = vmatpush1.msra.mxu0 0.0
  %62 = vmatprep.subr.mxu0 0.0
  %63 = vmatpush1.msra.mxu0 0.0
  %64 = vmatprep.subr.mxu0 0.0
  %65 = vmatpush1.msra.mxu0 0.0
  %66 = vmatprep.subr.mxu0 0.0
  %67 = vmatpush1.msra.mxu0 0.0
  %68 = vmatprep.subr.mxu0 0.0
  %69 = vmatpush1.msra.mxu0 0.0
  %70 = vmatprep.subr.mxu0 0.0
  %71 = vmatpush1.msra.mxu0 0.0
  %72 = vmatprep.subr.mxu0 0.0
  %73 = vmatpush1.msra.mxu0 0.0
  %74 = vmatprep.subr.mxu0 0.0
  %75 = vmatpush1.msra.mxu0 0.0
  %76 = vmatprep.subr.mxu0 0.0
  %77 = vmatpush1.msra.mxu0 0.0
  %78 = vmatprep.subr.mxu0 0.0
  %79 = vmatpush1.msra.mxu0 0.0
  %80 = vmatprep.subr.mxu0 0.0
  %81 = vmatpush1.msra.mxu0 0.0
  %82 = vmatprep.subr.mxu0 0.0
  %83 = vmatpush1.msra.mxu0 0.0
  %84 = vmatprep.subr.mxu0 0.0
  %85 = vmatpush1.msra.mxu0 0.0
  %86 = vmatprep.subr.mxu0 0.0
  %87 = vmatpush1.msra.mxu0 0.0
  %88 = vmatprep.subr.mxu0 0.0
  %89 = vmatpush1.msra.mxu0 0.0
  %90 = vmatprep.subr.mxu0 0.0
  %91 = vmatpush1.msra.mxu0 0.0
  %92 = vmatprep.subr.mxu0 0.0
  %93 = vmatpush1.msra.mxu0 0.0
  %94 = vmatprep.subr.mxu0 0.0
  %95 = vmatpush1.msra.mxu0 0.0
  %96 = vmatprep.subr.mxu0 0.0
  %97 = vmatpush1.msra.mxu0 0.0
  %98 = vmatprep.subr.mxu0 0.0
  %99 = vmatpush1.msra.mxu0 0.0
  %100 = vmatprep.subr.mxu0 0.0
  %101 = vmatpush1.msra.mxu0 0.0
  %102 = vmatprep.subr.mxu0 0.0
  %103 = vmatpush1.msra.mxu0 0.0
  %104 = vmatprep.subr.mxu0 0.0
  %105 = vmatpush1.msra.mxu0 0.0
  %106 = vmatprep.subr.mxu0 0.0
  %107 = vmatpush1.msra.mxu0 0.0
  %108 = vmatprep.mubr.f32.mxu0 0.0
  %109 = vmatmul.mubr.f32.gmra.mrb[0].mxu0 %v38
  %v110 = vpop.f32.mrb[0].mxu0
  %v111 = vadd.f32 %v34, %v110
  %v112 = vpop.f32.mrb[0].mxu0
  %113 = vdwg.mxu0
  %v114 = vmax.f32 %v111, 0.0
  %v115 = vld [vmem:[%s3] sm:$0xff]
  %v116 = vld [vmem:[%s3 + $0x8] sm:$0xff]
  %v117 = vld [vmem:[%s3 + $0x10] sm:$0xff]
  %v118 = vld [vmem:[%s3 + $0x18] sm:$0xff]
  %v119 = vld [vmem:[%s4] sm:$0x1]
  %v121 = vlaneseq
  %v122 = vshrl.u32 %v121, 7
  %v123 = vsub.s32 0, %v122
  %v124 = vrot.slane %v119, %v123
  %vm126 = vcmask 261120
  %v128 = vsel %vm126, %v114, 0
  %130 = vmatprep.subr.mxu0 0.0
  %131 = vmatpush1.msra.mxu0 %v115
  %132 = vmatprep.subr.mxu0 0.0
  %133 = vmatpush1.msra.mxu0 %v116
  %134 = vmatprep.subr.mxu0 0.0
  %135 = vmatpush1.msra.mxu0 %v117
  %136 = vmatprep.subr.mxu0 0.0
  %137 = vmatpush1.msra.mxu0 %v118
  %138 = vmatprep.subr.mxu0 0.0
  %139 = vmatpush1.msra.mxu0 0.0
  %140 = vmatprep.subr.mxu0 0.0
  %141 = vmatpush1.msra.mxu0 0.0
  %142 = vmatprep.subr.mxu0 0.0
  %143 = vmatpush1.msra.mxu0 0.0
  %144 = vmatprep.subr.mxu0 0.0
  %145 = vmatpush1.msra.mxu0 0.0
  %146 = vmatprep.subr.mxu0 0.0
  %147 = vmatpush1.msra.mxu0 0.0
  %148 = vmatprep.subr.mxu0 0.0
  %149 = vmatpush1.msra.mxu0 0.0
  %150 = vmatprep.subr.mxu0 0.0
  %151 = vmatpush1.msra.mxu0 0.0
  %152 = vmatprep.subr.mxu0 0.0
  %153 = vmatpush1.msra.mxu0 0.0
  %154 = vmatprep.subr.mxu0 0.0
  %155 = vmatpush1.msra.mxu0 0.0
  %156 = vmatprep.subr.mxu0 0.0
  %157 = vmatpush1.msra.mxu0 0.0
  %158 = vmatprep.subr.mxu0 0.0
  %159 = vmatpush1.msra.mxu0 0.0
  %160 = vmatprep.subr.mxu0 0.0
  %161 = vmatpush1.msra.mxu0 0.0
  %162 = vmatprep.subr.mxu0 0.0
  %163 = vmatpush1.msra.mxu0 0.0
  %164 = vmatprep.subr.mxu0 0.0
  %165 = vmatpush1.msra.mxu0 0.0
  %166 = vmatprep.subr.mxu0 0.0
  %167 = vmatpush1.msra.mxu0 0.0
  %168 = vmatprep.subr.mxu0 0.0
  %169 = vmatpush1.msra.mxu0 0.0
  %170 = vmatprep.subr.mxu0 0.0
  %171 = vmatpush1.msra.mxu0 0.0
  %172 = vmatprep.subr.mxu0 0.0
  %173 = vmatpush1.msra.mxu0 0.0
  %174 = vmatprep.subr.mxu0 0.0
  %175 = vmatpush1.msra.mxu0 0.0
  %176 = vmatprep.subr.mxu0 0.0
  %177 = vmatpush1.msra.mxu0 0.0
  %178 = vmatprep.subr.mxu0 0.0
  %179 = vmatpush1.msra.mxu0 0.0
  %180 = vmatprep.subr.mxu0 0.0
  %181 = vmatpush1.msra.mxu0 0.0
  %182 = vmatprep.subr.mxu0 0.0
  %183 = vmatpush1.msra.mxu0 0.0
  %184 = vmatprep.subr.mxu0 0.0
  %185 = vmatpush1.msra.mxu0 0.0
  %186 = vmatprep.subr.mxu0 0.0
  %187 = vmatpush1.msra.mxu0 0.0
  %188 = vmatprep.subr.mxu0 0.0
  %189 = vmatpush1.msra.mxu0 0.0
  %190 = vmatprep.subr.mxu0 0.0
  %191 = vmatpush1.msra.mxu0 0.0
  %192 = vmatprep.subr.mxu0 0.0
  %193 = vmatpush1.msra.mxu0 0.0
  %194 = vmatprep.mubr.f32.mxu0 0.0
  %195 = vmatmul.mubr.f32.gmra.mrb[0].mxu0 %v128
  %v196 = vpop.f32.mrb[0].mxu0
  %v197 = vadd.f32 %v124, %v196
  %v198 = vpop.f32.mrb[0].mxu0
  %199 = vdwg.mxu0
  %v200 = vmax.f32 %v197, 0.0
  %v201 = vld [vmem:[%s5] sm:$0xff]
  %v202 = vld [vmem:[%s5 + $0x8] sm:$0xff]
  %v203 = vld [vmem:[%s6] sm:$0x1]
  %v205 = vlaneseq
  %v206 = vshrl.u32 %v205, 7
  %v207 = vsub.s32 0, %v206
  %v208 = vrot.slane %v203, %v207
  %vm210 = vcmask 130048
  %v212 = vsel %vm210, %v200, 0
  %214 = vmatprep.subr.mxu0 0.0
  %215 = vmatpush1.msra.mxu0 %v201
  %216 = vmatprep.subr.mxu0 0.0
  %217 = vmatpush1.msra.mxu0 %v202
  %218 = vmatprep.subr.mxu0 0.0
  %219 = vmatpush1.msra.mxu0 0.0
  %220 = vmatprep.subr.mxu0 0.0
  %221 = vmatpush1.msra.mxu0 0.0
  %222 = vmatprep.subr.mxu0 0.0
  %223 = vmatpush1.msra.mxu0 0.0
  %224 = vmatprep.subr.mxu0 0.0
  %225 = vmatpush1.msra.mxu0 0.0
  %226 = vmatprep.subr.mxu0 0.0
  %227 = vmatpush1.msra.mxu0 0.0
  %228 = vmatprep.subr.mxu0 0.0
  %229 = vmatpush1.msra.mxu0 0.0
  %230 = vmatprep.subr.mxu0 0.0
  %231 = vmatpush1.msra.mxu0 0.0
  %232 = vmatprep.subr.mxu0 0.0
  %233 = vmatpush1.msra.mxu0 0.0
  %234 = vmatprep.subr.mxu0 0.0
  %235 = vmatpush1.msra.mxu0 0.0
  %236 = vmatprep.subr.mxu0 0.0
  %237 = vmatpush1.msra.mxu0 0.0
  %238 = vmatprep.subr.mxu0 0.0
  %239 = vmatpush1.msra.mxu0 0.0
  %240 = vmatprep.subr.mxu0 0.0
  %241 = vmatpush1.msra.mxu0 0.0
  %242 = vmatprep.subr.mxu0 0.0
  %243 = vmatpush1.msra.mxu0 0.0
  %244 = vmatprep.subr.mxu0 0.0
  %245 = vmatpush1.msra.mxu0 0.0
  %246 = vmatprep.subr.mxu0 0.0
  %247 = vmatpush1.msra.mxu0 0.0
  %248 = vmatprep.subr.mxu0 0.0
  %249 = vmatpush1.msra.mxu0 0.0
  %250 = vmatprep.subr.mxu0 0.0
  %251 = vmatpush1.msra.mxu0 0.0
  %252 = vmatprep.subr.mxu0 0.0
  %253 = vmatpush1.msra.mxu0 0.0
  %254 = vmatprep.subr.mxu0 0.0
  %255 = vmatpush1.msra.mxu0 0.0
  %256 = vmatprep.subr.mxu0 0.0
  %257 = vmatpush1.msra.mxu0 0.0
  %258 = vmatprep.subr.mxu0 0.0
  %259 = vmatpush1.msra.mxu0 0.0
  %260 = vmatprep.subr.mxu0 0.0
  %261 = vmatpush1.msra.mxu0 0.0
  %262 = vmatprep.subr.mxu0 0.0
  %263 = vmatpush1.msra.mxu0 0.0
  %264 = vmatprep.subr.mxu0 0.0
  %265 = vmatpush1.msra.mxu0 0.0
  %266 = vmatprep.subr.mxu0 0.0
  %267 = vmatpush1.msra.mxu0 0.0
  %268 = vmatprep.subr.mxu0 0.0
  %269 = vmatpush1.msra.mxu0 0.0
  %270 = vmatprep.subr.mxu0 0.0
  %271 = vmatpush1.msra.mxu0 0.0
  %272 = vmatprep.subr.mxu0 0.0
  %273 = vmatpush1.msra.mxu0 0.0
  %274 = vmatprep.subr.mxu0 0.0
  %275 = vmatpush1.msra.mxu0 0.0
  %276 = vmatprep.subr.mxu0 0.0
  %277 = vmatpush1.msra.mxu0 0.0
  %278 = vmatprep.mubr.f32.mxu0 0.0
  %279 = vmatmul.mubr.f32.gmra.mrb[0].mxu0 %v212
  %v280 = vpop.f32.mrb[0].mxu0
  %v281 = vadd.f32 %v208, %v280
  %v282 = vpop.f32.mrb[0].mxu0
  %283 = vdwg.mxu0
  %vm284 = vcmask 15360
  %285 = vst.msk [vmem:[%s7] sm:$0xff] %vm284, %v281
  // Predicated region
  $region30: #{mlp_forward.1} parent=0 // pred_check
    _
  $region31: #{mlp_forward.1} parent=0 // pred_check_branch
    %287 = sbr.rel (0) target = $region33
  $region32: #{mlp_forward.1} parent=0 // pred_region
    _
  $region33: #{mlp_forward.1} parent=0 // pred_fallthru
    _
  // Predicated region
  $region34: #{mlp_forward.1} parent=0 // pred_check
    _
  $region35: #{mlp_forward.1} parent=0 // pred_check_branch
    %289 = sbr.rel (0) target = $region37
  $region36: #{mlp_forward.1} parent=0 // pred_region
    _
  $region37: #{mlp_forward.1} parent=0 // pred_fallthru
    _

</llo_original>
